<compile_context>
chip_gen: v6e
topology: v6e:2x2x1
jax: 0.10.0
libtpu: 0.0.40
codegen_flags: <defaults>
</compile_context>

<pallas_src>
import functools

import jax
import jax.numpy as jnp
from jax.experimental import pallas as pl
from jax.experimental.pallas import tpu as pltpu


def _round_up(x: int, m: int) -> int:
    return ((x + m - 1) // m) * m


def _mlp_kernel(x_ref, w1_ref, b1_ref, w2_ref, b2_ref, o_ref):
    # One batch-row tile per grid step.  W1/W2/b1/b2 have constant index_maps so they are
    # fetched once and stay VMEM-resident across the grid.
    cdt = jnp.bfloat16
    x = x_ref[...].astype(cdt)                       # no-op if caller already passes bf16
    h = jnp.dot(x, w1_ref[...].astype(cdt),
                preferred_element_type=jnp.float32)  # MXU, f32 accumulation
    h = jnp.maximum(h + b1_ref[...], 0.0)            # f32 bias + ReLU epilogue (VPU)
    y = jnp.dot(h.astype(cdt), w2_ref[...].astype(cdt),
                preferred_element_type=jnp.float32)  # MXU, f32 accumulation
    o_ref[...] = (y + b2_ref[...]).astype(o_ref.dtype)


@functools.partial(jax.jit, static_argnames=("block_m",))
def mlp_forward(x, w1, b1, w2, b2, *, block_m: int = 1024):
    """Pallas equivalent of MLP.forward: out(relu(hidden(x))).

    x: (M, 20); w1: (20, 256); b1: (256,); w2: (256, 10); b2: (10,).
    Weights are stored (in, out) (== PyTorch nn.Linear weight.T), ideally bf16.
    """
    M, K = x.shape
    Kw, H = w1.shape
    Hw, N = w2.shape
    assert K == Kw and H == Hw and b1.shape[-1] == H and b2.shape[-1] == N
    assert block_m % 8 == 0

    # Biases kept f32 for the epilogue (tiny; reshape is negligible).
    b1r = jnp.reshape(b1, (1, H)).astype(jnp.float32)
    b2r = jnp.reshape(b2, (1, N)).astype(jnp.float32)

    # Batch tiling: no M padding; Pallas handles the ragged last block (output writes past M
    # are masked, garbage rows never reach real output).  Mid-size batches are split into at
    # least two grid steps so both v7x TensorCores are used; toy batches (<=8) use one tile.
    if M <= 8:
        tm = M                                  # equals full array dim -> legal block
    elif M <= block_m:
        tm = _round_up(-(-M // 2), 8)           # >= 2 tiles, sublane-aligned
    else:
        tm = block_m
    grid = (pl.cdiv(M, tm),)

    flops = 2 * M * K * H + 2 * M * H * N
    bytes_accessed = (x.size * x.dtype.itemsize
                      + w1.size * w1.dtype.itemsize + w2.size * w2.dtype.itemsize
                      + b1r.size * 4 + b2r.size * 4
                      + M * N * x.dtype.itemsize)

    out = pl.pallas_call(
        _mlp_kernel,
        out_shape=jax.ShapeDtypeStruct((M, N), x.dtype),
        grid_spec=pltpu.PrefetchScalarGridSpec(
            num_scalar_prefetch=0,
            grid=grid,
            in_specs=[
                pl.BlockSpec((tm, K), lambda i: (i, 0)),   # X row tile (K unpadded: full dim)
                pl.BlockSpec((K, H), lambda i: (0, 0)),    # W1 (VMEM-resident)
                pl.BlockSpec((1, H), lambda i: (0, 0)),    # b1 (resident)
                pl.BlockSpec((H, N), lambda i: (0, 0)),    # W2 (resident, N unpadded)
                pl.BlockSpec((1, N), lambda i: (0, 0)),    # b2 (resident)
            ],
            out_specs=pl.BlockSpec((tm, N), lambda i: (i, 0)),
        ),
        compiler_params=pltpu.CompilerParams(
            dimension_semantics=("parallel",),
        ),
        cost_estimate=pl.CostEstimate(
            flops=flops, transcendentals=0, bytes_accessed=bytes_accessed),
    )(x, w1, b1r, w2, b2r)

    return out


if __name__ == "__main__":
    key = jax.random.PRNGKey(0)
    kx, k1, kb1, k2, kb2 = jax.random.split(key, 5)

    IN_F, HID, OUT_F = 20, 256, 10
    # Note: the original file's example `X = torch.rand((2, 4))` is inconsistent with
    # Linear(20, 256); the forward implies 20 input features, so batch=2, features=20 here.
    x = jax.random.uniform(kx, (2, IN_F), dtype=jnp.float32)

    # Parameters built ONCE at init (hoisted out of the forward path); weights stored
    # (in, out) == PyTorch weight.T, in bf16 for MXU-native matmuls; biases f32.
    w1 = (jax.random.normal(k1, (IN_F, HID), dtype=jnp.float32) * 0.1).astype(jnp.bfloat16)
    b1 = jax.random.normal(kb1, (HID,), dtype=jnp.float32) * 0.1
    w2 = (jax.random.normal(k2, (HID, OUT_F), dtype=jnp.float32) * 0.1).astype(jnp.bfloat16)
    b2 = jax.random.normal(kb2, (OUT_F,), dtype=jnp.float32) * 0.1

    out = jax.block_until_ready(mlp_forward(x, w1, b1, w2, b2))

    # Reference: same (bf16) params upcast to f32 in plain JAX; only intermediate bf16
    # rounding in the kernel differs, so a loose-ish tolerance is used.
    def ref_fwd(xr):
        h = jnp.maximum(xr.astype(jnp.float32) @ w1.astype(jnp.float32) + b1, 0.0)
        return h @ w2.astype(jnp.float32) + b2

    ref = ref_fwd(x)
    assert out.shape == (2, OUT_F) and out.dtype == x.dtype
    assert jnp.allclose(out, ref, atol=2e-2, rtol=2e-2), "mismatch vs reference (batch=2)"

    # Exercise the multi-tile path (grid > 1, ragged last block) as well.
    xb = jax.random.uniform(kx, (300, IN_F), dtype=jnp.float32)
    outb = jax.block_until_ready(mlp_forward(xb, w1, b1, w2, b2))
    assert jnp.allclose(outb, ref_fwd(xb), atol=2e-2, rtol=2e-2), "mismatch vs reference (batch=300)"

    print("KERNEL_OK")
</pallas_src>

<mosaic_0001>
module attributes {stable_mosaic.version = 11 : i64} {
  func.func @_mlp_kernel(%arg0: i32, %arg1: memref<2x20xf32, #tpu.memory_space<vmem>>, %arg2: memref<20x256xbf16, #tpu.memory_space<vmem>>, %arg3: memref<1x256xf32, #tpu.memory_space<vmem>>, %arg4: memref<256x10xbf16, #tpu.memory_space<vmem>>, %arg5: memref<1x10xf32, #tpu.memory_space<vmem>>, %arg6: memref<2x10xf32, #tpu.memory_space<vmem>>) attributes {dimension_semantics = [#tpu.dimension_semantics<parallel>], iteration_bounds = array<i64: 1>, scalar_prefetch = 0 : i64, scratch_operands = 0 : i64, tpu.core_type = #tpu.core_type<tc>, window_params = [{transform_indices = @transform_0, window_bounds = array<i64: 2, 20>}, {pipeline_mode = #tpu.pipeline_mode<synchronous>, transform_indices = @transform_1, window_bounds = array<i64: 20, 256>}, {pipeline_mode = #tpu.pipeline_mode<synchronous>, transform_indices = @transform_2, window_bounds = array<i64: 1, 256>}, {pipeline_mode = #tpu.pipeline_mode<synchronous>, transform_indices = @transform_3, window_bounds = array<i64: 256, 10>}, {pipeline_mode = #tpu.pipeline_mode<synchronous>, transform_indices = @transform_4, window_bounds = array<i64: 1, 10>}, {transform_indices = @transform_5, window_bounds = array<i64: 2, 10>}]} {
    %c0 = arith.constant 0 : index
    %c0_0 = arith.constant 0 : index
    %0 = vector.load %arg1[%c0, %c0_0] : memref<2x20xf32, #tpu.memory_space<vmem>>, vector<2x20xf32>
    %1 = arith.truncf %0 : vector<2x20xf32> to vector<2x20xbf16>
    %c0_1 = arith.constant 0 : index
    %c0_2 = arith.constant 0 : index
    %2 = vector.load %arg2[%c0_1, %c0_2] : memref<20x256xbf16, #tpu.memory_space<vmem>>, vector<20x256xbf16>
    %cst = arith.constant dense<0.000000e+00> : vector<2x256xf32>
    %3 = tpu.matmul %1, %2, %cst {dimension_numbers = #tpu.dot_dimension_numbers<[1], [0], [0], [1], [0, 0, 1, 1], [], []>} : vector<2x20xbf16>, vector<20x256xbf16>, vector<2x256xf32> -> vector<2x256xf32>
    %c0_3 = arith.constant 0 : index
    %c0_4 = arith.constant 0 : index
    %4 = vector.load %arg3[%c0_3, %c0_4] : memref<1x256xf32, #tpu.memory_space<vmem>>, vector<1x256xf32>
    %5 = vector.broadcast %4 : vector<1x256xf32> to vector<2x256xf32>
    %6 = arith.addf %3, %5 : vector<2x256xf32>
    %cst_5 = arith.constant 0.000000e+00 : f32
    %7 = vector.broadcast %cst_5 : f32 to vector<2x256xf32>
    %8 = arith.maximumf %6, %7 : vector<2x256xf32>
    %9 = arith.truncf %8 : vector<2x256xf32> to vector<2x256xbf16>
    %c0_6 = arith.constant 0 : index
    %c0_7 = arith.constant 0 : index
    %10 = vector.load %arg4[%c0_6, %c0_7] : memref<256x10xbf16, #tpu.memory_space<vmem>>, vector<256x10xbf16>
    %cst_8 = arith.constant dense<0.000000e+00> : vector<2x10xf32>
    %11 = tpu.matmul %9, %10, %cst_8 {dimension_numbers = #tpu.dot_dimension_numbers<[1], [0], [0], [1], [0, 0, 1, 1], [], []>} : vector<2x256xbf16>, vector<256x10xbf16>, vector<2x10xf32> -> vector<2x10xf32>
    %c0_9 = arith.constant 0 : index
    %c0_10 = arith.constant 0 : index
    %12 = vector.load %arg5[%c0_9, %c0_10] : memref<1x10xf32, #tpu.memory_space<vmem>>, vector<1x10xf32>
    %13 = vector.broadcast %12 : vector<1x10xf32> to vector<2x10xf32>
    %14 = arith.addf %11, %13 : vector<2x10xf32>
    %c0_11 = arith.constant 0 : index
    %c0_12 = arith.constant 0 : index
    %15 = vector.load %arg6[%c0_11, %c0_12] : memref<2x10xf32, #tpu.memory_space<vmem>>, vector<2x10xf32>
    tpu.vector_store %arg6[%c0_11, %c0_12], %14 {strides = array<i32>} : memref<2x10xf32, #tpu.memory_space<vmem>>, vector<2x10xf32>,
    return
  }
  func.func @transform_0(%arg0: i32) -> (i32, i32) {
    %c0_i32 = arith.constant 0 : i32
    %c0_i32_0 = arith.constant 0 : i32
    return %arg0, %c0_i32 : i32, i32
  }
  func.func @transform_1(%arg0: i32) -> (i32, i32) {
    %c0_i32 = arith.constant 0 : i32
    %c0_i32_0 = arith.constant 0 : i32
    %c0_i32_1 = arith.constant 0 : i32
    return %c0_i32, %c0_i32_0 : i32, i32
  }
  func.func @transform_2(%arg0: i32) -> (i32, i32) {
    %c0_i32 = arith.constant 0 : i32
    %c0_i32_0 = arith.constant 0 : i32
    %c0_i32_1 = arith.constant 0 : i32
    return %c0_i32, %c0_i32_0 : i32, i32
  }
  func.func @transform_3(%arg0: i32) -> (i32, i32) {
    %c0_i32 = arith.constant 0 : i32
    %c0_i32_0 = arith.constant 0 : i32
    %c0_i32_1 = arith.constant 0 : i32
    return %c0_i32, %c0_i32_0 : i32, i32
  }
  func.func @transform_4(%arg0: i32) -> (i32, i32) {
    %c0_i32 = arith.constant 0 : i32
    %c0_i32_0 = arith.constant 0 : i32
    %c0_i32_1 = arith.constant 0 : i32
    return %c0_i32, %c0_i32_0 : i32, i32
  }
  func.func @transform_5(%arg0: i32) -> (i32, i32) {
    %c0_i32 = arith.constant 0 : i32
    %c0_i32_0 = arith.constant 0 : i32
    return %arg0, %c0_i32 : i32, i32
  }
}

</mosaic_0001>

<llo_original>
// kernel: mlp_forward.1
$region0: #{mlp_forward.1}
  #allocation0 [shape = 'u32[]', space=smem, size = 0x4, offset = 0x4, fixed_abs, tag = 'smem constant byte address 0x4 - core index']
  #allocation1 [shape = 'u32[144,128]{1,0:T(1,128)}', space=vmem, size = 0x12000, scoped, tag = 'internal scratch']
  %s0 = inlined_call_operand.vmem [shape: f32[2,20], index: 0, kind: input, shape index: {}]
  %s1 = inlined_call_operand.vmem [shape: bf16[20,256], index: 1, kind: input, shape index: {}]
  %s2 = inlined_call_operand.vmem [shape: f32[1,256], index: 2, kind: input, shape index: {}]
  %s3 = inlined_call_operand.vmem [shape: bf16[256,10], index: 3, kind: input, shape index: {}]
  %s4 = inlined_call_operand.vmem [shape: f32[1,10], index: 4, kind: input, shape index: {}]
  %s5 = inlined_call_operand.hbm [shape: f32[2,10], index: 5, kind: output, shape index: {}]
  %s6 = sld [smem:[#allocation0]]
  $region30: #{mlp_forward.1} parent=0
    _
  %s8 = ssub.s32 1, %s6
  %s9 = scalar_select 0, %s8, %s6
  $region1: #{mlp_forward.1} parent=0
    #allocation2 [shape = 'u8[1024]{0}', space=vmem, size = 0x400, scoped, tag = 'output window, operand 0, single buffered']
    #allocation3 [shape = 's32[1]{0}', space=sflag, size = 0x4, scoped, tag = 'scoped memory for mlp_forward.1']
    %10 = vsyncpa [#allocation3], 0
    // Predicated region
    $region2: #{mlp_forward.1} parent=1 // pred_check
      _
    $region3: #{mlp_forward.1} parent=1 // pred_check_branch
      %12 = sbr.rel (0) target = $region5
    $region4: #{mlp_forward.1} parent=1 // pred_region
      _
    $region5: #{mlp_forward.1} parent=1 // pred_fallthru
      _
    // Predicated region
    $region6: #{mlp_forward.1} parent=1 // pred_check
      _
    $region7: #{mlp_forward.1} parent=1 // pred_check_branch
      %14 = sbr.rel (0) target = $region9
    $region8: #{mlp_forward.1} parent=1 // pred_region
      _
    $region9: #{mlp_forward.1} parent=1 // pred_fallthru
      _
    // Predicated region
    $region10: #{mlp_forward.1} parent=1 // pred_check
      _
    $region11: #{mlp_forward.1} parent=1 // pred_check_branch
      %16 = sbr.rel (0) target = $region13
    $region12: #{mlp_forward.1} parent=1 // pred_region
      _
    $region13: #{mlp_forward.1} parent=1 // pred_fallthru
      _
    // Predicated region
    $region14: #{mlp_forward.1} parent=1 // pred_check
      _
    $region15: #{mlp_forward.1} parent=1 // pred_check_branch
      %18 = sbr.rel (0) target = $region17
    $region16: #{mlp_forward.1} parent=1 // pred_region
      _
    $region17: #{mlp_forward.1} parent=1 // pred_fallthru
      _
    // Predicated region
    $region18: #{mlp_forward.1} parent=1 // pred_check
      _
    $region19: #{mlp_forward.1} parent=1 // pred_check_branch
      %20 = sbr.rel (0) target = $region21
    $region20: #{mlp_forward.1} parent=1 // pred_region
      _
    $region21: #{mlp_forward.1} parent=1 // pred_fallthru
      _
    %v22 = vld [vmem:[%s0] sm:$0x3]
    %v23 = vpack.c.bf16 %v22, %v22
    %v24 = vld [vmem:[%s1] sm:$0xff]
    %v25 = vld [vmem:[%s1 + $0x8] sm:$0xff]
    %v26 = vld [vmem:[%s1 + $0x10] sm:$0x33]
    %v27 = vld [vmem:[%s2] sm:$0x3]
    %v29 = vlaneseq
    %v30 = vshrl.u32 %v29, 7
    %v31 = vsub.s32 0, %v30
    %v32 = vrot.slane %v27, %v31
    %v33 = vlaneseq
    %v34 = vshrl.u32 %v33, 7
    %v35 = vsub.s32 1, %v34
    %v36 = vrot.slane %v27, %v35
    %v42 = vunpack.c.l.b16 %v24
    %v43 = vunpack.c.h.b16 %v24
    %v44 = vunpack.c.l.b16 %v25
    %v45 = vunpack.c.h.b16 %v25
    %v46 = vunpack.c.l.b16 %v26
    %v47 = vunpack.c.h.b16 %v26
    %v48 = vpack.c.b16 %v44, %v42
    %v49 = vpack.c.b16 %v45, %v43
    %v50 = vpack.c.b16 %v46, %v46
    %v51 = vpack.c.b16 %v47, %v47
    %vm54 = vcmask 162816
    %v56 = vsel %vm54, %v23, 0
    %vm58 = vcmask 1041408
    %v60 = vsel %vm58, %v50, 0
    %v63 = vsel %vm58, %v51, 0
    %65 = vmatprep.subr.bf16.mxu0 0
    %66 = vmatpush1.bf16.msra.mxu0 0
    %67 = vmatprep.subr.bf16.mxu0 0
    %68 = vmatpush1.bf16.msra.mxu0 0
    %69 = vmatprep.subr.bf16.mxu0 0
    %70 = vmatpush1.bf16.msra.mxu0 0
    %71 = vmatprep.subr.bf16.mxu0 0
    %72 = vmatpush1.bf16.msra.mxu0 0
    %73 = vmatprep.subr.bf16.mxu0 0
    %74 = vmatpush1.bf16.msra.mxu0 0
    %75 = vmatprep.subr.bf16.mxu0 0
    %76 = vmatpush1.bf16.msra.mxu0 0
    %77 = vmatprep.subr.bf16.mxu0 %v63
    %78 = vmatpush1.bf16.msra.mxu0 %v60
    %79 = vmatprep.subr.bf16.mxu0 %v49
    %80 = vmatpush1.bf16.msra.mxu0 %v48
    %81 = vmatprep.subr.bf16.mxu0 0
    %82 = vmatpush2.bf16.msra.mxu0 0
    %83 = vmatprep.subr.bf16.mxu0 0
    %84 = vmatpush2.bf16.msra.mxu0 0
    %85 = vmatprep.subr.bf16.mxu0 0
    %86 = vmatpush2.bf16.msra.mxu0 0
    %87 = vmatprep.subr.bf16.mxu0 0
    %88 = vmatpush2.bf16.msra.mxu0 0
    %89 = vmatprep.subr.bf16.mxu0 0
    %90 = vmatpush2.bf16.msra.mxu0 0
    %91 = vmatprep.subr.bf16.mxu0 0
    %92 = vmatpush2.bf16.msra.mxu0 0
    %93 = vmatprep.subr.bf16.mxu0 0
    %94 = vmatpush2.bf16.msra.mxu0 0
    %95 = vmatprep.subr.bf16.mxu0 0
    %96 = vmatpush2.bf16.msra.mxu0 0
    %97 = vmatprep.mubr.bf16.mxu0 0
    %98 = vmatmul.mubr.bf16.gmra.mxu0 %v56
    %v99 = vpop.f32.mrf.mxu0
    %v100 = vadd.f32 %v32, %v99
    %v101 = vpop.f32.mrf.mxu0
    %v102 = vadd.f32 %v36, %v101
    %v103 = vpop.f32.mrf.mxu0
    %v104 = vpop.f32.mrf.mxu0
    %105 = vdwg.mxu0
    %v106 = vmax.f32 %v100, 0.0
    %v107 = vmax.f32 %v102, 0.0
    %v108 = vpack.c.bf16 %v106, %v106
    %v109 = vpack.c.bf16 %v107, %v107
    %v110 = vld [vmem:[%s3] sm:$0xf]
    %v111 = vld [vmem:[%s3 + $0x4] sm:$0xf]
    %v112 = vld [vmem:[%s3 + $0x8] sm:$0xf]
    %v113 = vld [vmem:[%s3 + $0xc] sm:$0xf]
    %v114 = vld [vmem:[%s3 + $0x10] sm:$0xf]
    %v115 = vld [vmem:[%s3 + $0x14] sm:$0xf]
    %v116 = vld [vmem:[%s3 + $0x18] sm:$0xf]
    %v117 = vld [vmem:[%s3 + $0x1c] sm:$0xf]
    %v118 = vld [vmem:[%s3 + $0x20] sm:$0xf]
    %v119 = vld [vmem:[%s3 + $0x24] sm:$0xf]
    %v120 = vld [vmem:[%s3 + $0x28] sm:$0xf]
    %v121 = vld [vmem:[%s3 + $0x2c] sm:$0xf]
    %v122 = vld [vmem:[%s3 + $0x30] sm:$0xf]
    %v123 = vld [vmem:[%s3 + $0x34] sm:$0xf]
    %v124 = vld [vmem:[%s3 + $0x38] sm:$0xf]
    %v125 = vld [vmem:[%s3 + $0x3c] sm:$0xf]
    %v126 = vld [vmem:[%s3 + $0x40] sm:$0xf]
    %v127 = vld [vmem:[%s3 + $0x44] sm:$0xf]
    %v128 = vld [vmem:[%s3 + $0x48] sm:$0xf]
    %v129 = vld [vmem:[%s3 + $0x4c] sm:$0xf]
    %v130 = vld [vmem:[%s3 + $0x50] sm:$0xf]
    %v131 = vld [vmem:[%s3 + $0x54] sm:$0xf]
    %v132 = vld [vmem:[%s3 + $0x58] sm:$0xf]
    %v133 = vld [vmem:[%s3 + $0x5c] sm:$0xf]
    %v134 = vld [vmem:[%s3 + $0x60] sm:$0xf]
    %v135 = vld [vmem:[%s3 + $0x64] sm:$0xf]
    %v136 = vld [vmem:[%s3 + $0x68] sm:$0xf]
    %v137 = vld [vmem:[%s3 + $0x6c] sm:$0xf]
    %v138 = vld [vmem:[%s3 + $0x70] sm:$0xf]
    %v139 = vld [vmem:[%s3 + $0x74] sm:$0xf]
    %v140 = vld [vmem:[%s3 + $0x78] sm:$0xf]
    %v141 = vld [vmem:[%s3 + $0x7c] sm:$0xf]
    %v142 = vld [vmem:[%s4] sm:$0x1]
    %v144 = vlaneseq
    %v145 = vshrl.u32 %v144, 7
    %v146 = vsub.s32 0, %v145
    %v147 = vrot.slane %v142, %v146
    %v181 = vunpack.c.l.b16 %v110
    %v182 = vunpack.c.l.b16 %v111
    %v183 = vunpack.c.l.b16 %v112
    %v184 = vunpack.c.l.b16 %v113
    %v185 = vunpack.c.l.b16 %v114
    %v186 = vunpack.c.l.b16 %v115
    %v187 = vunpack.c.l.b16 %v116
    %v188 = vunpack.c.l.b16 %v117
    %v189 = vunpack.c.l.b16 %v118
    %v190 = vunpack.c.l.b16 %v119
    %v191 = vunpack.c.l.b16 %v120
    %v192 = vunpack.c.l.b16 %v121
    %v193 = vunpack.c.l.b16 %v122
    %v194 = vunpack.c.l.b16 %v123
    %v195 = vunpack.c.l.b16 %v124
    %v196 = vunpack.c.l.b16 %v125
    %v197 = vunpack.c.l.b16 %v126
    %v198 = vunpack.c.l.b16 %v127
    %v199 = vunpack.c.l.b16 %v128
    %v200 = vunpack.c.l.b16 %v129
    %v201 = vunpack.c.l.b16 %v130
    %v202 = vunpack.c.l.b16 %v131
    %v203 = vunpack.c.l.b16 %v132
    %v204 = vunpack.c.l.b16 %v133
    %v205 = vunpack.c.l.b16 %v134
    %v206 = vunpack.c.l.b16 %v135
    %v207 = vunpack.c.l.b16 %v136
    %v208 = vunpack.c.l.b16 %v137
    %v209 = vunpack.c.l.b16 %v138
    %v210 = vunpack.c.l.b16 %v139
    %v211 = vunpack.c.l.b16 %v140
    %v212 = vunpack.c.l.b16 %v141
    %v213 = vpack.c.b16 %v182, %v181
    %v214 = vpack.c.b16 %v184, %v183
    %v215 = vpack.c.b16 %v186, %v185
    %v216 = vpack.c.b16 %v188, %v187
    %v217 = vpack.c.b16 %v190, %v189
    %v218 = vpack.c.b16 %v192, %v191
    %v219 = vpack.c.b16 %v194, %v193
    %v220 = vpack.c.b16 %v196, %v195
    %v221 = vpack.c.b16 %v198, %v197
    %v222 = vpack.c.b16 %v200, %v199
    %v223 = vpack.c.b16 %v202, %v201
    %v224 = vpack.c.b16 %v204, %v203
    %v225 = vpack.c.b16 %v206, %v205
    %v226 = vpack.c.b16 %v208, %v207
    %v227 = vpack.c.b16 %v210, %v209
    %v228 = vpack.c.b16 %v212, %v211
    %245 = vmatprep.subr.bf16.mxu0 0
    %246 = vmatpush1.bf16.msra.mxu0 %v220
    %247 = vmatprep.subr.bf16.mxu0 0
    %248 = vmatpush1.bf16.msra.mxu0 %v219
    %249 = vmatprep.subr.bf16.mxu0 0
    %250 = vmatpush1.bf16.msra.mxu0 %v218
    %251 = vmatprep.subr.bf16.mxu0 0
    %252 = vmatpush1.bf16.msra.mxu0 %v217
    %253 = vmatprep.subr.bf16.mxu0 0
    %254 = vmatpush1.bf16.msra.mxu0 %v216
    %255 = vmatprep.subr.bf16.mxu0 0
    %256 = vmatpush1.bf16.msra.mxu0 %v215
    %257 = vmatprep.subr.bf16.mxu0 0
    %258 = vmatpush1.bf16.msra.mxu0 %v214
    %259 = vmatprep.subr.bf16.mxu0 0
    %260 = vmatpush1.bf16.msra.mxu0 %v213
    %261 = vmatprep.subr.bf16.mxu0 0
    %262 = vmatpush2.bf16.msra.mxu0 %v228
    %263 = vmatprep.subr.bf16.mxu0 0
    %264 = vmatpush2.bf16.msra.mxu0 %v227
    %265 = vmatprep.subr.bf16.mxu0 0
    %266 = vmatpush2.bf16.msra.mxu0 %v226
    %267 = vmatprep.subr.bf16.mxu0 0
    %268 = vmatpush2.bf16.msra.mxu0 %v225
    %269 = vmatprep.subr.bf16.mxu0 0
    %270 = vmatpush2.bf16.msra.mxu0 %v224
    %271 = vmatprep.subr.bf16.mxu0 0
    %272 = vmatpush2.bf16.msra.mxu0 %v223
    %273 = vmatprep.subr.bf16.mxu0 0
    %274 = vmatpush2.bf16.msra.mxu0 %v222
    %275 = vmatprep.subr.bf16.mxu0 0
    %276 = vmatpush2.bf16.msra.mxu0 %v221
    %277 = vmatprep.mubr.bf16.mxu0 %v109
    %278 = vmatmul.mubr.bf16.gmra.mxu0 %v108
    %v279 = vpop.f32.mrf.mxu0
    %v280 = vadd.f32 %v147, %v279
    %v281 = vpop.f32.mrf.mxu0
    %v282 = vpop.f32.mrf.mxu0
    %v283 = vpop.f32.mrf.mxu0
    %284 = vdwg.mxu0
    %vm285 = vcmask 74752
    %286 = vst.msk [vmem:[#allocation2] sm:$0x3] %vm285, %v280
    // Predicated region
    $region22: #{mlp_forward.1} parent=1 // pred_check
      _
    $region23: #{mlp_forward.1} parent=1 // pred_check_branch
      %288 = sbr.rel (0) target = $region25
    $region24: #{mlp_forward.1} parent=1 // pred_region
      %s290 = ssub.s32 32, 32
      %291 = vsyncadd [#allocation3], %s290
      %s293 = sshll.u32 [#allocation2], 4
      %s294 = int_to_ptr.vmem [resolvable:$true] %s293
      %296 = dma.vmem_to_hbm [thread:$0]  %s294, 32, %s5, [#allocation3]
    $region25: #{mlp_forward.1} parent=1 // pred_fallthru
      _
    // Predicated region
    $region26: #{mlp_forward.1} parent=1 // pred_check
      _
    $region27: #{mlp_forward.1} parent=1 // pred_check_branch
      %298 = sbr.rel (0) target = $region29
    $region28: #{mlp_forward.1} parent=1 // pred_region
      %299 = dma.done [#allocation3], 32
    $region29: #{mlp_forward.1} parent=1 // pred_fallthru
      _
    %300 = vsyncpa [#allocation3], 1

</llo_original>
